<compile_context>
chip_gen: v5e
topology: v5e:2x2
jax: 0.10.0
libtpu: 0.0.40
codegen_flags: <defaults>
</compile_context>

<pallas_src>
import functools
import math

import jax
import jax.numpy as jnp
from jax.experimental import pallas as pl
from jax.experimental.pallas import tpu as pltpu


def _round_up(x, m):
    return ((x + m - 1) // m) * m


# ------------------------------- Pallas kernel -------------------------------

def _residual_stack_kernel(x_ref, w1_ref, b1_ref, w2_ref, b2_ref, o_ref, *,
                           depth, tb, L):
    """Whole residual stack for TB batch elements, flattened to one (M, C) slab.

    x_ref : (M, Cp)             M = tb*L rows, channels-last, Cp lane-padded (f32)
    w1_ref: (depth, 3*Cp, Hp)   conv1 weights, im2col-fused (tap-major), bf16
    b1_ref: (depth, 1, Hp)      conv1 bias, f32
    w2_ref: (depth, 3*Hp, Cp)   conv2 weights, im2col-fused, bf16
    b2_ref: (depth, 1, Cp)      conv2 bias, f32
    o_ref : (M, Cp)
    """
    M = tb * L
    x = x_ref[...].astype(jnp.float32)                        # (M, Cp)

    # Per-row sequence-position masks for "same" padding at each batch element's
    # edges. Rolling the flattened (M, C) slab only "leaks" across batch-element
    # boundaries at exactly the rows we zero, so flatten-then-roll is exact.
    row = jax.lax.broadcasted_iota(jnp.int32, (M, 1), 0)
    if (L & (L - 1)) == 0:                                     # power-of-two L
        l_pos = jnp.bitwise_and(row, L - 1)
    else:
        l_pos = jax.lax.rem(row, jnp.int32(L))
    not_first = (l_pos != 0).astype(jnp.float32)               # zeros tap k=0 at l==0
    not_last = (l_pos != L - 1).astype(jnp.float32)            # zeros tap k=2 at l==L-1

    def im2col_taps(a):
        # a: (M, C) f32 -> (M, 3*C) bf16 slab [a[m-1] | a[m] | a[m+1]] with zeroed
        # edge rows. pltpu.roll rides the XLU slot; no pad / unaligned slices.
        prev = pltpu.roll(a, shift=1, axis=0) * not_first      # a[m-1]
        nxt = pltpu.roll(a, shift=M - 1, axis=0) * not_last    # a[m+1] (== roll -1)
        return jnp.concatenate([prev, a, nxt], axis=-1).astype(jnp.bfloat16)

    # depth is tiny here (2) -> full unroll is fine per review guidance.
    # TODO(synk): switch to lax.fori_loop + per-layer weight streaming for large depth.
    for d in range(depth):
        # conv1 (Cin -> H), all 3 taps in one bf16 MXU matmul, f32 accumulation.
        h = jnp.dot(im2col_taps(x), w1_ref[d],
                    preferred_element_type=jnp.float32)        # (M, Hp) f32
        h = jnp.maximum(h + b1_ref[d], 0.0)                    # f32 elementwise
        # conv2 (H -> Cin), single fused matmul.
        y = jnp.dot(im2col_taps(h), w2_ref[d],
                    preferred_element_type=jnp.float32)        # (M, Cp) f32
        # residual add + ReLU (f32).
        x = jnp.maximum(x + y + b2_ref[d], 0.0)

    o_ref[...] = x.astype(o_ref.dtype)                         # lane-dense store


# --------------------------------- wrapper -----------------------------------

def _choose_batch_tile(n, L):
    """Fold enough batch per grid step that M = tb*L targets ~512 rows
    (>=256 recommended for v6e/v7x MXUs), keeping tb*L sublane-aligned."""
    tb = max(1, min(n, max(1, 512 // L)))
    if L % 8 != 0:
        f = 8 // math.gcd(L, 8)
        tb = max(f, (tb // f) * f)    # keep tb*L a multiple of 8
    return tb


def secondary_stack_forward(x_ncl, w1f, b1, w2f, b2):
    """x_ncl: (N, Cin, L) like PyTorch Conv1d input; returns (N, Cin, L)."""
    N, Cin, L = x_ncl.shape
    depth = w1f.shape[0]
    Cp = w1f.shape[1] // 3
    assert b2.shape[-1] == Cp and Cin <= Cp

    tb = _choose_batch_tile(N, L)
    grid_n = pl.cdiv(N, tb)           # NOTE: for v7x keep >=2 steps when N allows
    n_pad = grid_n * tb
    M = tb * L

    # channels-last, zero-pad channels to Cp (lane-dense) and batch to n_pad,
    # then flatten (batch, length) into one row axis.
    x_nlc = jnp.transpose(x_ncl, (0, 2, 1))                    # (N, L, Cin)
    x_nlc = jnp.pad(x_nlc, ((0, n_pad - N), (0, 0), (0, Cp - Cin)))
    x2d = x_nlc.reshape(n_pad * L, Cp)

    kernel = functools.partial(_residual_stack_kernel, depth=depth, tb=tb, L=L)
    out2d = pl.pallas_call(
        kernel,
        out_shape=jax.ShapeDtypeStruct((n_pad * L, Cp), x_ncl.dtype),
        grid_spec=pltpu.PrefetchScalarGridSpec(
            num_scalar_prefetch=0,
            grid=(grid_n,),
            in_specs=[
                pl.BlockSpec((M, Cp), lambda n: (n, 0)),
                # Weights/biases: full-array blocks with constant index_map
                # (resident across the whole grid).
                pl.BlockSpec(w1f.shape, lambda n: (0, 0, 0)),
                pl.BlockSpec(b1.shape, lambda n: (0, 0, 0)),
                pl.BlockSpec(w2f.shape, lambda n: (0, 0, 0)),
                pl.BlockSpec(b2.shape, lambda n: (0, 0, 0)),
            ],
            out_specs=pl.BlockSpec((M, Cp), lambda n: (n, 0)),
        ),
        compiler_params=pltpu.CompilerParams(
            dimension_semantics=("parallel",)),
    )(x2d, w1f, b1, w2f, b2)

    out = out2d.reshape(n_pad, L, Cp)[:N, :, :Cin]             # drop padding
    return jnp.transpose(out, (0, 2, 1))                       # back to NCL


def pack_params(torch_params, in_size, lane=128):
    """Repack PyTorch Conv1d params into im2col-fused, lane-padded matrices.

    PyTorch layout: conv1.weight (H, Cin, 3), conv1.bias (H,),
                    conv2.weight (Cin, H, 3), conv2.bias (Cin,).
    Returns w1f (D, 3*Cp, Hp) bf16, b1 (D, 1, Hp) f32,
            w2f (D, 3*Hp, Cp) bf16, b2 (D, 1, Cp) f32.
    Row order of the fused K axis is tap-major [k=0 | k=1 | k=2], matching the
    kernel's [prev | cur | next] slab.
    """
    Cin = in_size
    H = torch_params[0][1].shape[0]
    Cp = _round_up(Cin, lane)
    Hp = _round_up(H, lane)

    w1s, b1s, w2s, b2s = [], [], [], []
    for w1_t, b1_t, w2_t, b2_t in torch_params:
        w1 = jnp.transpose(w1_t, (2, 1, 0))                    # (3, Cin, H)
        w1 = jnp.pad(w1, ((0, 0), (0, Cp - Cin), (0, Hp - H)))
        w1s.append(w1.reshape(3 * Cp, Hp))
        w2 = jnp.transpose(w2_t, (2, 1, 0))                    # (3, H, Cin)
        w2 = jnp.pad(w2, ((0, 0), (0, Hp - H), (0, Cp - Cin)))
        w2s.append(w2.reshape(3 * Hp, Cp))
        b1s.append(jnp.pad(b1_t, (0, Hp - H))[None, :])
        b2s.append(jnp.pad(b2_t, (0, Cp - Cin))[None, :])

    return (jnp.stack(w1s).astype(jnp.bfloat16),
            jnp.stack(b1s).astype(jnp.float32),
            jnp.stack(w2s).astype(jnp.bfloat16),
            jnp.stack(b2s).astype(jnp.float32))


# ----------------------------- pure-JAX reference ----------------------------

def _conv1d_same(x, w, b):
    # x: (N, Cin, L), w: (Cout, Cin, 3), b: (Cout,) — matches torch Conv1d(padding=1)
    out = jax.lax.conv_general_dilated(
        x, w, window_strides=(1,), padding=((1, 1),),
        dimension_numbers=("NCH", "OIH", "NCH"))
    return out + b[None, :, None]


def reference_forward(x_ncl, torch_params):
    x = x_ncl
    for (w1, b1, w2, b2) in torch_params:
        h = jnp.maximum(_conv1d_same(x, w1, b1), 0.0)
        y = _conv1d_same(h, w2, b2)
        x = jnp.maximum(x + y, 0.0)
    return x


# --------------------------------- main --------------------------------------

if __name__ == "__main__":
    N, Cin, L = 2, 4, 16          # batch, in_size (channels), sequence length
    H, depth = 32, 2              # hidden_size, depth

    key = jax.random.PRNGKey(0)
    key, kx = jax.random.split(key)
    x = jax.random.normal(kx, (N, Cin, L), dtype=jnp.float32)

    # Deterministic parameters in PyTorch Conv1d layout.
    torch_params = []
    for _ in range(depth):
        key, k1, k2, k3, k4 = jax.random.split(key, 5)
        w1_t = 0.1 * jax.random.normal(k1, (H, Cin, 3), dtype=jnp.float32)
        b1_t = 0.1 * jax.random.normal(k2, (H,), dtype=jnp.float32)
        w2_t = 0.1 * jax.random.normal(k3, (Cin, H, 3), dtype=jnp.float32)
        b2_t = 0.1 * jax.random.normal(k4, (Cin,), dtype=jnp.float32)
        torch_params.append((w1_t, b1_t, w2_t, b2_t))

    w1f, b1, w2f, b2 = pack_params(torch_params, in_size=Cin)

    out = jax.block_until_ready(secondary_stack_forward(x, w1f, b1, w2f, b2))
    ref = jax.block_until_ready(reference_forward(x, torch_params))

    assert out.shape == (N, Cin, L)
    max_err = jnp.max(jnp.abs(out - ref))
    # bf16 MXU operands (f32 accumulation) -> relaxed tolerance vs. the f32 reference.
    assert jnp.allclose(out, ref, rtol=2e-2, atol=2e-2), f"max abs err {max_err}"

    print("KERNEL_OK")
</pallas_src>

<mosaic_0001>
module attributes {stable_mosaic.version = 11 : i64} {
  func.func @_residual_stack_kernel(%arg0: i32, %arg1: memref<32x128xf32, #tpu.memory_space<vmem>>, %arg2: memref<2x384x128xbf16, #tpu.memory_space<vmem>>, %arg3: memref<2x1x128xf32, #tpu.memory_space<vmem>>, %arg4: memref<2x384x128xbf16, #tpu.memory_space<vmem>>, %arg5: memref<2x1x128xf32, #tpu.memory_space<vmem>>, %arg6: memref<32x128xf32, #tpu.memory_space<vmem>>) attributes {dimension_semantics = [#tpu.dimension_semantics<parallel>], iteration_bounds = array<i64: 1>, scalar_prefetch = 0 : i64, scratch_operands = 0 : i64, tpu.core_type = #tpu.core_type<tc>, window_params = [{transform_indices = @transform_0, window_bounds = array<i64: 32, 128>}, {pipeline_mode = #tpu.pipeline_mode<synchronous>, transform_indices = @transform_1, window_bounds = array<i64: 2, 384, 128>}, {pipeline_mode = #tpu.pipeline_mode<synchronous>, transform_indices = @transform_2, window_bounds = array<i64: 2, 1, 128>}, {pipeline_mode = #tpu.pipeline_mode<synchronous>, transform_indices = @transform_3, window_bounds = array<i64: 2, 384, 128>}, {pipeline_mode = #tpu.pipeline_mode<synchronous>, transform_indices = @transform_4, window_bounds = array<i64: 2, 1, 128>}, {transform_indices = @transform_5, window_bounds = array<i64: 32, 128>}]} {
    %c0 = arith.constant 0 : index
    %c0_0 = arith.constant 0 : index
    %0 = vector.load %arg1[%c0, %c0_0] : memref<32x128xf32, #tpu.memory_space<vmem>>, vector<32x128xf32>
    %1 = tpu.iota {dimensions = array<i32: 0>} : vector<32x1xi32>
    %c15_i32 = arith.constant 15 : i32
    %2 = vector.broadcast %c15_i32 : i32 to vector<32x1xi32>
    %3 = arith.andi %1, %2 : vector<32x1xi32>
    %c0_i32 = arith.constant 0 : i32
    %4 = vector.broadcast %c0_i32 : i32 to vector<32x1xi32>
    %5 = arith.cmpi ne, %3, %4 : vector<32x1xi32>
    %6 = arith.extui %5 : vector<32x1xi1> to vector<32x1xi32>
    %7 = arith.sitofp %6 : vector<32x1xi32> to vector<32x1xf32>
    %c15_i32_1 = arith.constant 15 : i32
    %8 = vector.broadcast %c15_i32_1 : i32 to vector<32x1xi32>
    %9 = arith.cmpi ne, %3, %8 : vector<32x1xi32>
    %10 = arith.extui %9 : vector<32x1xi1> to vector<32x1xi32>
    %11 = arith.sitofp %10 : vector<32x1xi32> to vector<32x1xf32>
    %c1_i32 = arith.constant 1 : i32
    %12 = tpu.dynamic_rotate %0 by %c1_i32 dim 0 : vector<32x128xf32>, i32 -> vector<32x128xf32>
    %13 = vector.broadcast %7 : vector<32x1xf32> to vector<32x128xf32>
    %14 = arith.mulf %12, %13 : vector<32x128xf32>
    %c31_i32 = arith.constant 31 : i32
    %15 = tpu.dynamic_rotate %0 by %c31_i32 dim 0 : vector<32x128xf32>, i32 -> vector<32x128xf32>
    %16 = vector.broadcast %11 : vector<32x1xf32> to vector<32x128xf32>
    %17 = arith.mulf %15, %16 : vector<32x128xf32>
    %18 = tpu.concatenate %14, %0, %17 in 1 : vector<32x128xf32>, vector<32x128xf32>, vector<32x128xf32> -> vector<32x384xf32>
    %19 = arith.truncf %18 : vector<32x384xf32> to vector<32x384xbf16>
    %c0_2 = arith.constant 0 : index
    %c0_3 = arith.constant 0 : index
    %c0_4 = arith.constant 0 : index
    %20 = vector.load %arg2[%c0_2, %c0_3, %c0_4] : memref<2x384x128xbf16, #tpu.memory_space<vmem>>, vector<1x384x128xbf16>
    %21 = vector.shape_cast %20 : vector<1x384x128xbf16> to vector<384x128xbf16>
    %cst = arith.constant dense<0.000000e+00> : vector<32x128xf32>
    %22 = tpu.matmul %19, %21, %cst {dimension_numbers = #tpu.dot_dimension_numbers<[1], [0], [0], [1], [0, 0, 1, 1], [], []>} : vector<32x384xbf16>, vector<384x128xbf16>, vector<32x128xf32> -> vector<32x128xf32>
    %c0_5 = arith.constant 0 : index
    %c0_6 = arith.constant 0 : index
    %c0_7 = arith.constant 0 : index
    %23 = vector.load %arg3[%c0_5, %c0_6, %c0_7] : memref<2x1x128xf32, #tpu.memory_space<vmem>>, vector<1x1x128xf32>
    %24 = vector.shape_cast %23 : vector<1x1x128xf32> to vector<1x128xf32>
    %25 = vector.broadcast %24 : vector<1x128xf32> to vector<32x128xf32>
    %26 = arith.addf %22, %25 : vector<32x128xf32>
    %cst_8 = arith.constant 0.000000e+00 : f32
    %27 = vector.broadcast %cst_8 : f32 to vector<32x128xf32>
    %28 = arith.maximumf %26, %27 : vector<32x128xf32>
    %c1_i32_9 = arith.constant 1 : i32
    %29 = tpu.dynamic_rotate %28 by %c1_i32_9 dim 0 : vector<32x128xf32>, i32 -> vector<32x128xf32>
    %30 = vector.broadcast %7 : vector<32x1xf32> to vector<32x128xf32>
    %31 = arith.mulf %29, %30 : vector<32x128xf32>
    %c31_i32_10 = arith.constant 31 : i32
    %32 = tpu.dynamic_rotate %28 by %c31_i32_10 dim 0 : vector<32x128xf32>, i32 -> vector<32x128xf32>
    %33 = vector.broadcast %11 : vector<32x1xf32> to vector<32x128xf32>
    %34 = arith.mulf %32, %33 : vector<32x128xf32>
    %35 = tpu.concatenate %31, %28, %34 in 1 : vector<32x128xf32>, vector<32x128xf32>, vector<32x128xf32> -> vector<32x384xf32>
    %36 = arith.truncf %35 : vector<32x384xf32> to vector<32x384xbf16>
    %c0_11 = arith.constant 0 : index
    %c0_12 = arith.constant 0 : index
    %c0_13 = arith.constant 0 : index
    %37 = vector.load %arg4[%c0_11, %c0_12, %c0_13] : memref<2x384x128xbf16, #tpu.memory_space<vmem>>, vector<1x384x128xbf16>
    %38 = vector.shape_cast %37 : vector<1x384x128xbf16> to vector<384x128xbf16>
    %cst_14 = arith.constant dense<0.000000e+00> : vector<32x128xf32>
    %39 = tpu.matmul %36, %38, %cst_14 {dimension_numbers = #tpu.dot_dimension_numbers<[1], [0], [0], [1], [0, 0, 1, 1], [], []>} : vector<32x384xbf16>, vector<384x128xbf16>, vector<32x128xf32> -> vector<32x128xf32>
    %40 = arith.addf %0, %39 : vector<32x128xf32>
    %c0_15 = arith.constant 0 : index
    %c0_16 = arith.constant 0 : index
    %c0_17 = arith.constant 0 : index
    %41 = vector.load %arg5[%c0_15, %c0_16, %c0_17] : memref<2x1x128xf32, #tpu.memory_space<vmem>>, vector<1x1x128xf32>
    %42 = vector.shape_cast %41 : vector<1x1x128xf32> to vector<1x128xf32>
    %43 = vector.broadcast %42 : vector<1x128xf32> to vector<32x128xf32>
    %44 = arith.addf %40, %43 : vector<32x128xf32>
    %cst_18 = arith.constant 0.000000e+00 : f32
    %45 = vector.broadcast %cst_18 : f32 to vector<32x128xf32>
    %46 = arith.maximumf %44, %45 : vector<32x128xf32>
    %c1_i32_19 = arith.constant 1 : i32
    %47 = tpu.dynamic_rotate %46 by %c1_i32_19 dim 0 : vector<32x128xf32>, i32 -> vector<32x128xf32>
    %48 = vector.broadcast %7 : vector<32x1xf32> to vector<32x128xf32>
    %49 = arith.mulf %47, %48 : vector<32x128xf32>
    %c31_i32_20 = arith.constant 31 : i32
    %50 = tpu.dynamic_rotate %46 by %c31_i32_20 dim 0 : vector<32x128xf32>, i32 -> vector<32x128xf32>
    %51 = vector.broadcast %11 : vector<32x1xf32> to vector<32x128xf32>
    %52 = arith.mulf %50, %51 : vector<32x128xf32>
    %53 = tpu.concatenate %49, %46, %52 in 1 : vector<32x128xf32>, vector<32x128xf32>, vector<32x128xf32> -> vector<32x384xf32>
    %54 = arith.truncf %53 : vector<32x384xf32> to vector<32x384xbf16>
    %c1 = arith.constant 1 : index
    %c0_21 = arith.constant 0 : index
    %c0_22 = arith.constant 0 : index
    %55 = vector.load %arg2[%c1, %c0_21, %c0_22] : memref<2x384x128xbf16, #tpu.memory_space<vmem>>, vector<1x384x128xbf16>
    %56 = vector.shape_cast %55 : vector<1x384x128xbf16> to vector<384x128xbf16>
    %cst_23 = arith.constant dense<0.000000e+00> : vector<32x128xf32>
    %57 = tpu.matmul %54, %56, %cst_23 {dimension_numbers = #tpu.dot_dimension_numbers<[1], [0], [0], [1], [0, 0, 1, 1], [], []>} : vector<32x384xbf16>, vector<384x128xbf16>, vector<32x128xf32> -> vector<32x128xf32>
    %c1_24 = arith.constant 1 : index
    %c0_25 = arith.constant 0 : index
    %c0_26 = arith.constant 0 : index
    %58 = vector.load %arg3[%c1_24, %c0_25, %c0_26] : memref<2x1x128xf32, #tpu.memory_space<vmem>>, vector<1x1x128xf32>
    %59 = vector.shape_cast %58 : vector<1x1x128xf32> to vector<1x128xf32>
    %60 = vector.broadcast %59 : vector<1x128xf32> to vector<32x128xf32>
    %61 = arith.addf %57, %60 : vector<32x128xf32>
    %cst_27 = arith.constant 0.000000e+00 : f32
    %62 = vector.broadcast %cst_27 : f32 to vector<32x128xf32>
    %63 = arith.maximumf %61, %62 : vector<32x128xf32>
    %c1_i32_28 = arith.constant 1 : i32
    %64 = tpu.dynamic_rotate %63 by %c1_i32_28 dim 0 : vector<32x128xf32>, i32 -> vector<32x128xf32>
    %65 = vector.broadcast %7 : vector<32x1xf32> to vector<32x128xf32>
    %66 = arith.mulf %64, %65 : vector<32x128xf32>
    %c31_i32_29 = arith.constant 31 : i32
    %67 = tpu.dynamic_rotate %63 by %c31_i32_29 dim 0 : vector<32x128xf32>, i32 -> vector<32x128xf32>
    %68 = vector.broadcast %11 : vector<32x1xf32> to vector<32x128xf32>
    %69 = arith.mulf %67, %68 : vector<32x128xf32>
    %70 = tpu.concatenate %66, %63, %69 in 1 : vector<32x128xf32>, vector<32x128xf32>, vector<32x128xf32> -> vector<32x384xf32>
    %71 = arith.truncf %70 : vector<32x384xf32> to vector<32x384xbf16>
    %c1_30 = arith.constant 1 : index
    %c0_31 = arith.constant 0 : index
    %c0_32 = arith.constant 0 : index
    %72 = vector.load %arg4[%c1_30, %c0_31, %c0_32] : memref<2x384x128xbf16, #tpu.memory_space<vmem>>, vector<1x384x128xbf16>
    %73 = vector.shape_cast %72 : vector<1x384x128xbf16> to vector<384x128xbf16>
    %cst_33 = arith.constant dense<0.000000e+00> : vector<32x128xf32>
    %74 = tpu.matmul %71, %73, %cst_33 {dimension_numbers = #tpu.dot_dimension_numbers<[1], [0], [0], [1], [0, 0, 1, 1], [], []>} : vector<32x384xbf16>, vector<384x128xbf16>, vector<32x128xf32> -> vector<32x128xf32>
    %75 = arith.addf %46, %74 : vector<32x128xf32>
    %c1_34 = arith.constant 1 : index
    %c0_35 = arith.constant 0 : index
    %c0_36 = arith.constant 0 : index
    %76 = vector.load %arg5[%c1_34, %c0_35, %c0_36] : memref<2x1x128xf32, #tpu.memory_space<vmem>>, vector<1x1x128xf32>
    %77 = vector.shape_cast %76 : vector<1x1x128xf32> to vector<1x128xf32>
    %78 = vector.broadcast %77 : vector<1x128xf32> to vector<32x128xf32>
    %79 = arith.addf %75, %78 : vector<32x128xf32>
    %cst_37 = arith.constant 0.000000e+00 : f32
    %80 = vector.broadcast %cst_37 : f32 to vector<32x128xf32>
    %81 = arith.maximumf %79, %80 : vector<32x128xf32>
    %c0_38 = arith.constant 0 : index
    %c0_39 = arith.constant 0 : index
    %82 = vector.load %arg6[%c0_38, %c0_39] : memref<32x128xf32, #tpu.memory_space<vmem>>, vector<32x128xf32>
    tpu.vector_store %arg6[%c0_38, %c0_39], %81 {strides = array<i32>} : memref<32x128xf32, #tpu.memory_space<vmem>>, vector<32x128xf32>,
    return
  }
  func.func @transform_0(%arg0: i32) -> (i32, i32) {
    %c0_i32 = arith.constant 0 : i32
    %c0_i32_0 = arith.constant 0 : i32
    return %arg0, %c0_i32 : i32, i32
  }
  func.func @transform_1(%arg0: i32) -> (i32, i32, i32) {
    %c0_i32 = arith.constant 0 : i32
    %c0_i32_0 = arith.constant 0 : i32
    %c0_i32_1 = arith.constant 0 : i32
    %c0_i32_2 = arith.constant 0 : i32
    return %c0_i32, %c0_i32_0, %c0_i32_1 : i32, i32, i32
  }
  func.func @transform_2(%arg0: i32) -> (i32, i32, i32) {
    %c0_i32 = arith.constant 0 : i32
    %c0_i32_0 = arith.constant 0 : i32
    %c0_i32_1 = arith.constant 0 : i32
    %c0_i32_2 = arith.constant 0 : i32
    return %c0_i32, %c0_i32_0, %c0_i32_1 : i32, i32, i32
  }
  func.func @transform_3(%arg0: i32) -> (i32, i32, i32) {
    %c0_i32 = arith.constant 0 : i32
    %c0_i32_0 = arith.constant 0 : i32
    %c0_i32_1 = arith.constant 0 : i32
    %c0_i32_2 = arith.constant 0 : i32
    return %c0_i32, %c0_i32_0, %c0_i32_1 : i32, i32, i32
  }
  func.func @transform_4(%arg0: i32) -> (i32, i32, i32) {
    %c0_i32 = arith.constant 0 : i32
    %c0_i32_0 = arith.constant 0 : i32
    %c0_i32_1 = arith.constant 0 : i32
    %c0_i32_2 = arith.constant 0 : i32
    return %c0_i32, %c0_i32_0, %c0_i32_1 : i32, i32, i32
  }
  func.func @transform_5(%arg0: i32) -> (i32, i32) {
    %c0_i32 = arith.constant 0 : i32
    %c0_i32_0 = arith.constant 0 : i32
    return %arg0, %c0_i32 : i32, i32
  }
}

</mosaic_0001>

<llo_original>
// kernel: tpu_custom_call.1
$region0: #{tpu_custom_call.1}
  #allocation0 [shape = 'u32[]', space=smem, size = 0x4, offset = 0x4, fixed_abs, tag = 'smem constant byte address 0x4 - core index']
  #allocation1 [shape = 'u32[72,128]{1,0:T(1,128)}', space=vmem, size = 0x9000, scoped, tag = 'internal scratch']
  %s0 = inlined_call_operand.hbm [shape: f32[32,128], index: 0, kind: input, shape index: {}]
  %s1 = inlined_call_operand.hbm [shape: bf16[2,384,128], index: 1, kind: input, shape index: {}]
  %s2 = inlined_call_operand.hbm [shape: f32[2,1,128], index: 2, kind: input, shape index: {}]
  %s3 = inlined_call_operand.hbm [shape: bf16[2,384,128], index: 3, kind: input, shape index: {}]
  %s4 = inlined_call_operand.vmem [shape: f32[2,1,128], index: 4, kind: input, shape index: {}]
  %s5 = inlined_call_operand.hbm [shape: f32[32,128], index: 5, kind: output, shape index: {}]
  %s6 = sld [smem:[#allocation0]]
  $region46: #{tpu_custom_call.1} parent=0
    _
  %s8 = ssub.s32 1, %s6
  %s9 = scalar_select 0, %s8, %s6
  $region1: #{tpu_custom_call.1} parent=0
    #allocation2 [shape = 'u8[16384]{0}', space=vmem, size = 0x4000, scoped, tag = 'input window, operand 0, single buffered']
    #allocation3 [shape = 's32[1]{0}', space=sflag, size = 0x4, scoped, tag = 'scoped memory for tpu_custom_call.1']
    #allocation4 [shape = 's32[1]{0}', space=sflag, size = 0x4, scoped, tag = 'scoped memory for tpu_custom_call.1']
    #allocation5 [shape = 'u8[196608]{0}', space=vmem, size = 0x30000, scoped, tag = 'input window, operand 1, single buffered']
    #allocation6 [shape = 's32[1]{0}', space=sflag, size = 0x4, scoped, tag = 'scoped memory for tpu_custom_call.1']
    #allocation7 [shape = 'u8[1024]{0}', space=vmem, size = 0x400, scoped, tag = 'input window, operand 2, single buffered']
    #allocation8 [shape = 'u8[196608]{0}', space=vmem, size = 0x30000, scoped, tag = 'input window, operand 3, single buffered']
    #allocation9 [shape = 's32[1]{0}', space=sflag, size = 0x4, scoped, tag = 'scoped memory for tpu_custom_call.1']
    #allocation10 [shape = 'u8[16384]{0}', space=vmem, size = 0x4000, scoped, tag = 'output window, operand 0, single buffered']
    %10 = vsyncpa [#allocation3], 0
    %11 = vsyncpa [#allocation6], 0
    %12 = vsyncpa [#allocation9], 0
    %13 = vsyncpa [#allocation4], 0
    // Predicated region
    $region2: #{tpu_custom_call.1} parent=1 // pred_check
      _
    $region3: #{tpu_custom_call.1} parent=1 // pred_check_branch
      %15 = sbr.rel (0) target = $region5
    $region4: #{tpu_custom_call.1} parent=1 // pred_region
      %17 = vsyncadd [#allocation3], 0
      %s18 = sshll.u32 %s0, 4
      %s19 = int_to_ptr.hbm [resolvable:$true] %s18
      %s20 = sshll.u32 [#allocation2], 4
      %s21 = int_to_ptr.vmem [resolvable:$true] %s20
      %26 = dma.hbm_to_vmem [thread:$0]  %s19, 512, %s21, [#allocation3], 128, 128, 8
    $region5: #{tpu_custom_call.1} parent=1 // pred_fallthru
      _
    // Predicated region
    $region6: #{tpu_custom_call.1} parent=1 // pred_check
      _
    $region7: #{tpu_custom_call.1} parent=1 // pred_check_branch
      %28 = sbr.rel (0) target = $region9
    $region8: #{tpu_custom_call.1} parent=1 // pred_region
      %30 = vsyncadd [#allocation6], 0
      %s31 = sshll.u32 %s1, 4
      %s32 = int_to_ptr.hbm [resolvable:$true] %s31
      %s33 = sshll.u32 [#allocation5], 4
      %s34 = int_to_ptr.vmem [resolvable:$true] %s33
      %39 = dma.hbm_to_vmem [thread:$0]  %s32, 6144, %s34, [#allocation6], 64, 64, 4
    $region9: #{tpu_custom_call.1} parent=1 // pred_fallthru
      _
    // Predicated region
    $region10: #{tpu_custom_call.1} parent=1 // pred_check
      _
    $region11: #{tpu_custom_call.1} parent=1 // pred_check_branch
      %41 = sbr.rel (0) target = $region13
    $region12: #{tpu_custom_call.1} parent=1 // pred_region
      %43 = vsyncadd [#allocation6], 0
      %s44 = sshll.u32 %s2, 4
      %s45 = int_to_ptr.hbm [resolvable:$true] %s44
      %s46 = sshll.u32 [#allocation7], 4
      %s47 = int_to_ptr.vmem [resolvable:$true] %s46
      %52 = dma.hbm_to_vmem [thread:$0]  %s45, 32, %s47, [#allocation6], 16, 16, 1
    $region13: #{tpu_custom_call.1} parent=1 // pred_fallthru
      _
    // Predicated region
    $region14: #{tpu_custom_call.1} parent=1 // pred_check
      _
    $region15: #{tpu_custom_call.1} parent=1 // pred_check_branch
      %54 = sbr.rel (0) target = $region17
    $region16: #{tpu_custom_call.1} parent=1 // pred_region
      %56 = vsyncadd [#allocation9], 0
      %s57 = sshll.u32 %s3, 4
      %s58 = int_to_ptr.hbm [resolvable:$true] %s57
      %s59 = sshll.u32 [#allocation8], 4
      %s60 = int_to_ptr.vmem [resolvable:$true] %s59
      %65 = dma.hbm_to_vmem [thread:$0]  %s58, 6144, %s60, [#allocation9], 64, 64, 4
    $region17: #{tpu_custom_call.1} parent=1 // pred_fallthru
      _
    // Predicated region
    $region18: #{tpu_custom_call.1} parent=1 // pred_check
      _
    $region19: #{tpu_custom_call.1} parent=1 // pred_check_branch
      %67 = sbr.rel (0) target = $region21
    $region20: #{tpu_custom_call.1} parent=1 // pred_region
      _
    $region21: #{tpu_custom_call.1} parent=1 // pred_fallthru
      _
    // Predicated region
    $region22: #{tpu_custom_call.1} parent=1 // pred_check
      _
    $region23: #{tpu_custom_call.1} parent=1 // pred_check_branch
      %69 = sbr.rel (0) target = $region25
    $region24: #{tpu_custom_call.1} parent=1 // pred_region
      %71 = dma.done [#allocation3], 512
    $region25: #{tpu_custom_call.1} parent=1 // pred_fallthru
      _
    // Predicated region
    $region26: #{tpu_custom_call.1} parent=1 // pred_check
      _
    $region27: #{tpu_custom_call.1} parent=1 // pred_check_branch
      %73 = sbr.rel (0) target = $region29
    $region28: #{tpu_custom_call.1} parent=1 // pred_region
      %75 = dma.done [#allocation6], 6144
    $region29: #{tpu_custom_call.1} parent=1 // pred_fallthru
      _
    // Predicated region
    $region30: #{tpu_custom_call.1} parent=1 // pred_check
      _
    $region31: #{tpu_custom_call.1} parent=1 // pred_check_branch
      %77 = sbr.rel (0) target = $region33
    $region32: #{tpu_custom_call.1} parent=1 // pred_region
      %79 = dma.done [#allocation6], 32
    $region33: #{tpu_custom_call.1} parent=1 // pred_fallthru
      _
    // Predicated region
    $region34: #{tpu_custom_call.1} parent=1 // pred_check
      _
    $region35: #{tpu_custom_call.1} parent=1 // pred_check_branch
      %81 = sbr.rel (0) target = $region37
    $region36: #{tpu_custom_call.1} parent=1 // pred_region
      %83 = dma.done [#allocation9], 6144
    $region37: #{tpu_custom_call.1} parent=1 // pred_fallthru
      _
    %v84 = vld [vmem:[#allocation2] sm:$0xff]
    %v85 = vld [vmem:[#allocation2 + $0x8] sm:$0xff]
    %v86 = vld [vmem:[#allocation2 + $0x10] sm:$0xff]
    %v87 = vld [vmem:[#allocation2 + $0x18] sm:$0xff]
    %v88 = vlaneseq
    %v89 = vshrl.u32 %v88, 7
    %v90 = vadd.s32 %v89, 8
    %v91 = vadd.s32 %v89, 16
    %v92 = vadd.s32 %v89, 24
    %v93 = vand.u32 %v89, 15
    %v94 = vand.u32 %v90, 15
    %v95 = vand.u32 %v91, 15
    %v96 = vand.u32 %v92, 15
    %vm97 = vcmp.ne.s32.totalorder %v93, 0
    %vm98 = vcmp.ne.s32.totalorder %v94, 0
    %vm99 = vcmp.ne.s32.totalorder %v95, 0
    %vm100 = vcmp.ne.s32.totalorder %v96, 0
    %v101 = vsel %vm97, 1, 0
    %v102 = vsel %vm98, 1, 0
    %v103 = vsel %vm99, 1, 0
    %v104 = vsel %vm100, 1, 0
    %v105 = vcvt.s32.f32 %v101
    %v106 = vcvt.s32.f32 %v102
    %v107 = vcvt.s32.f32 %v103
    %v108 = vcvt.s32.f32 %v104
    %vm109 = vcmp.ne.s32.totalorder %v93, 15
    %vm110 = vcmp.ne.s32.totalorder %v94, 15
    %vm111 = vcmp.ne.s32.totalorder %v95, 15
    %vm112 = vcmp.ne.s32.totalorder %v96, 15
    %v113 = vsel %vm109, 1, 0
    %v114 = vsel %vm110, 1, 0
    %v115 = vsel %vm111, 1, 0
    %v116 = vsel %vm112, 1, 0
    %v117 = vcvt.s32.f32 %v113
    %v118 = vcvt.s32.f32 %v114
    %v119 = vcvt.s32.f32 %v115
    %v120 = vcvt.s32.f32 %v116
    %v121 = vrot.slane %v84, 7
    %v122 = vrot.slane %v85, 7
    %v123 = vrot.slane %v86, 7
    %v124 = vrot.slane %v87, 7
    %vm125 = vcmp.lt.s32.totalorder %v89, 1
    %v126 = vsel %vm125, %v123, %v124
    %v127 = vsel %vm125, %v122, %v123
    %v128 = vsel %vm125, %v121, %v122
    %v129 = vsel %vm125, %v124, %v121
    %v130 = vmul.f32 %v129, %v105
    %v131 = vmul.f32 %v128, %v106
    %v132 = vmul.f32 %v127, %v107
    %v133 = vmul.f32 %v126, %v108
    %v134 = vrot.slane %v84, 1
    %v135 = vrot.slane %v85, 1
    %v136 = vrot.slane %v86, 1
    %v137 = vrot.slane %v87, 1
    %vm138 = vcmp.lt.s32.totalorder %v89, 7
    %v139 = vsel %vm138, %v136, %v137
    %v140 = vsel %vm138, %v135, %v136
    %v141 = vsel %vm138, %v134, %v135
    %v142 = vsel %vm138, %v137, %v134
    %v143 = vmul.f32 %v141, %v117
    %v144 = vmul.f32 %v140, %v118
    %v145 = vmul.f32 %v139, %v119
    %v146 = vmul.f32 %v142, %v120
    %v147 = vpack.c.bf16 %v131, %v130
    %v148 = vpack.c.bf16 %v85, %v84
    %v149 = vpack.c.bf16 %v144, %v143
    %v150 = vpack.c.bf16 %v133, %v132
    %v151 = vpack.c.bf16 %v87, %v86
    %v152 = vpack.c.bf16 %v146, %v145
    %v153 = vld [vmem:[#allocation5] sm:$0xf]
    %v154 = vld [vmem:[#allocation5 + $0x4] sm:$0xf]
    %v155 = vld [vmem:[#allocation5 + $0x8] sm:$0xf]
    %v156 = vld [vmem:[#allocation5 + $0xc] sm:$0xf]
    %v157 = vld [vmem:[#allocation5 + $0x10] sm:$0xf]
    %v158 = vld [vmem:[#allocation5 + $0x14] sm:$0xf]
    %v159 = vld [vmem:[#allocation5 + $0x18] sm:$0xf]
    %v160 = vld [vmem:[#allocation5 + $0x1c] sm:$0xf]
    %v161 = vld [vmem:[#allocation5 + $0x20] sm:$0xf]
    %v162 = vld [vmem:[#allocation5 + $0x24] sm:$0xf]
    %v163 = vld [vmem:[#allocation5 + $0x28] sm:$0xf]
    %v164 = vld [vmem:[#allocation5 + $0x2c] sm:$0xf]
    %v165 = vld [vmem:[#allocation5 + $0x30] sm:$0xf]
    %v166 = vld [vmem:[#allocation5 + $0x34] sm:$0xf]
    %v167 = vld [vmem:[#allocation5 + $0x38] sm:$0xf]
    %v168 = vld [vmem:[#allocation5 + $0x3c] sm:$0xf]
    %v169 = vld [vmem:[#allocation5 + $0x40] sm:$0xf]
    %v170 = vld [vmem:[#allocation5 + $0x44] sm:$0xf]
    %v171 = vld [vmem:[#allocation5 + $0x48] sm:$0xf]
    %v172 = vld [vmem:[#allocation5 + $0x4c] sm:$0xf]
    %v173 = vld [vmem:[#allocation5 + $0x50] sm:$0xf]
    %v174 = vld [vmem:[#allocation5 + $0x54] sm:$0xf]
    %v175 = vld [vmem:[#allocation5 + $0x58] sm:$0xf]
    %v176 = vld [vmem:[#allocation5 + $0x5c] sm:$0xf]
    %v177 = vld [vmem:[#allocation5 + $0x60] sm:$0xf]
    %v178 = vld [vmem:[#allocation5 + $0x64] sm:$0xf]
    %v179 = vld [vmem:[#allocation5 + $0x68] sm:$0xf]
    %v180 = vld [vmem:[#allocation5 + $0x6c] sm:$0xf]
    %v181 = vld [vmem:[#allocation5 + $0x70] sm:$0xf]
    %v182 = vld [vmem:[#allocation5 + $0x74] sm:$0xf]
    %v183 = vld [vmem:[#allocation5 + $0x78] sm:$0xf]
    %v184 = vld [vmem:[#allocation5 + $0x7c] sm:$0xf]
    %v185 = vld [vmem:[#allocation5 + $0x80] sm:$0xf]
    %v186 = vld [vmem:[#allocation5 + $0x84] sm:$0xf]
    %v187 = vld [vmem:[#allocation5 + $0x88] sm:$0xf]
    %v188 = vld [vmem:[#allocation5 + $0x8c] sm:$0xf]
    %v189 = vld [vmem:[#allocation5 + $0x90] sm:$0xf]
    %v190 = vld [vmem:[#allocation5 + $0x94] sm:$0xf]
    %v191 = vld [vmem:[#allocation5 + $0x98] sm:$0xf]
    %v192 = vld [vmem:[#allocation5 + $0x9c] sm:$0xf]
    %v193 = vld [vmem:[#allocation5 + $0xa0] sm:$0xf]
    %v194 = vld [vmem:[#allocation5 + $0xa4] sm:$0xf]
    %v195 = vld [vmem:[#allocation5 + $0xa8] sm:$0xf]
    %v196 = vld [vmem:[#allocation5 + $0xac] sm:$0xf]
    %v197 = vld [vmem:[#allocation5 + $0xb0] sm:$0xf]
    %v198 = vld [vmem:[#allocation5 + $0xb4] sm:$0xf]
    %v199 = vld [vmem:[#allocation5 + $0xb8] sm:$0xf]
    %v200 = vld [vmem:[#allocation5 + $0xbc] sm:$0xf]
    %v201 = vld [vmem:[#allocation7] sm:$0x1]
    %v203 = vperm.slane %v201, 0
    %v253 = vunpack.c.l.b16 %v153
    %v254 = vunpack.c.l.b16 %v154
    %v255 = vunpack.c.l.b16 %v155
    %v256 = vunpack.c.l.b16 %v156
    %v257 = vunpack.c.l.b16 %v157
    %v258 = vunpack.c.l.b16 %v158
    %v259 = vunpack.c.l.b16 %v159
    %v260 = vunpack.c.l.b16 %v160
    %v261 = vunpack.c.l.b16 %v161
    %v262 = vunpack.c.l.b16 %v162
    %v263 = vunpack.c.l.b16 %v163
    %v264 = vunpack.c.l.b16 %v164
    %v265 = vunpack.c.l.b16 %v165
    %v266 = vunpack.c.l.b16 %v166
    %v267 = vunpack.c.l.b16 %v167
    %v268 = vunpack.c.l.b16 %v168
    %v269 = vunpack.c.l.b16 %v169
    %v270 = vunpack.c.l.b16 %v170
    %v271 = vunpack.c.l.b16 %v171
    %v272 = vunpack.c.l.b16 %v172
    %v273 = vunpack.c.l.b16 %v173
    %v274 = vunpack.c.l.b16 %v174
    %v275 = vunpack.c.l.b16 %v175
    %v276 = vunpack.c.l.b16 %v176
    %v277 = vunpack.c.l.b16 %v177
    %v278 = vunpack.c.l.b16 %v178
    %v279 = vunpack.c.l.b16 %v179
    %v280 = vunpack.c.l.b16 %v180
    %v281 = vunpack.c.l.b16 %v181
    %v282 = vunpack.c.l.b16 %v182
    %v283 = vunpack.c.l.b16 %v183
    %v284 = vunpack.c.l.b16 %v184
    %v285 = vunpack.c.l.b16 %v185
    %v286 = vunpack.c.l.b16 %v186
    %v287 = vunpack.c.l.b16 %v187
    %v288 = vunpack.c.l.b16 %v188
    %v289 = vunpack.c.l.b16 %v189
    %v290 = vunpack.c.l.b16 %v190
    %v291 = vunpack.c.l.b16 %v191
    %v292 = vunpack.c.l.b16 %v192
    %v293 = vunpack.c.l.b16 %v193
    %v294 = vunpack.c.l.b16 %v194
    %v295 = vunpack.c.l.b16 %v195
    %v296 = vunpack.c.l.b16 %v196
    %v297 = vunpack.c.l.b16 %v197
    %v298 = vunpack.c.l.b16 %v198
    %v299 = vunpack.c.l.b16 %v199
    %v300 = vunpack.c.l.b16 %v200
    %v301 = vpack.c.b16 %v254, %v253
    %v302 = vpack.c.b16 %v256, %v255
    %v303 = vpack.c.b16 %v258, %v257
    %v304 = vpack.c.b16 %v260, %v259
    %v305 = vpack.c.b16 %v262, %v261
    %v306 = vpack.c.b16 %v264, %v263
    %v307 = vpack.c.b16 %v266, %v265
    %v308 = vpack.c.b16 %v268, %v267
    %v309 = vpack.c.b16 %v270, %v269
    %v310 = vpack.c.b16 %v272, %v271
    %v311 = vpack.c.b16 %v274, %v273
    %v312 = vpack.c.b16 %v276, %v275
    %v313 = vpack.c.b16 %v278, %v277
    %v314 = vpack.c.b16 %v280, %v279
    %v315 = vpack.c.b16 %v282, %v281
    %v316 = vpack.c.b16 %v284, %v283
    %v317 = vpack.c.b16 %v286, %v285
    %v318 = vpack.c.b16 %v288, %v287
    %v319 = vpack.c.b16 %v290, %v289
    %v320 = vpack.c.b16 %v292, %v291
    %v321 = vpack.c.b16 %v294, %v293
    %v322 = vpack.c.b16 %v296, %v295
    %v323 = vpack.c.b16 %v298, %v297
    %v324 = vpack.c.b16 %v300, %v299
    %349 = vmatpush.bf16.msra.mxu0 %v308
    %350 = vmatpush.bf16.msra.mxu0 %v307
    %351 = vmatpush.bf16.msra.mxu0 %v306
    %352 = vmatpush.bf16.msra.mxu0 %v305
    %353 = vmatpush.bf16.msra.mxu0 %v304
    %354 = vmatpush.bf16.msra.mxu0 %v303
    %355 = vmatpush.bf16.msra.mxu0 %v302
    %356 = vmatpush.bf16.msra.mxu0 %v301
    %357 = vmatmul.bf16.gmra.mxu0 %v147
    %v358 = vpop.f32.mrf.mxu0
    %v359 = vadd.f32 %v203, %v358
    %v360 = vpop.f32.mrf.mxu0
    %v361 = vadd.f32 %v203, %v360
    %362 = vmatmul.bf16.gmra.mxu0 %v150
    %v363 = vpop.f32.mrf.mxu0
    %v364 = vadd.f32 %v203, %v363
    %v365 = vpop.f32.mrf.mxu0
    %v366 = vadd.f32 %v203, %v365
    %367 = vdwg.mxu0
    %368 = vmatpush.bf16.msra.mxu0 %v316
    %369 = vmatpush.bf16.msra.mxu0 %v315
    %370 = vmatpush.bf16.msra.mxu0 %v314
    %371 = vmatpush.bf16.msra.mxu0 %v313
    %372 = vmatpush.bf16.msra.mxu0 %v312
    %373 = vmatpush.bf16.msra.mxu0 %v311
    %374 = vmatpush.bf16.msra.mxu0 %v310
    %375 = vmatpush.bf16.msra.mxu0 %v309
    %376 = vmatmul.bf16.gmra.mxu0 %v148
    %v377 = vpop.f32.mrf.mxu0
    %v378 = vadd.f32 %v359, %v377
    %v379 = vpop.f32.mrf.mxu0
    %v380 = vadd.f32 %v361, %v379
    %381 = vmatmul.bf16.gmra.mxu0 %v151
    %v382 = vpop.f32.mrf.mxu0
    %v383 = vadd.f32 %v364, %v382
    %v384 = vpop.f32.mrf.mxu0
    %v385 = vadd.f32 %v366, %v384
    %386 = vdwg.mxu0
    %387 = vmatpush.bf16.msra.mxu0 %v324
    %388 = vmatpush.bf16.msra.mxu0 %v323
    %389 = vmatpush.bf16.msra.mxu0 %v322
    %390 = vmatpush.bf16.msra.mxu0 %v321
    %391 = vmatpush.bf16.msra.mxu0 %v320
    %392 = vmatpush.bf16.msra.mxu0 %v319
    %393 = vmatpush.bf16.msra.mxu0 %v318
    %394 = vmatpush.bf16.msra.mxu0 %v317
    %395 = vmatmul.bf16.gmra.mxu0 %v149
    %v396 = vpop.f32.mrf.mxu0
    %v397 = vadd.f32 %v378, %v396
    %v398 = vpop.f32.mrf.mxu0
    %v399 = vadd.f32 %v380, %v398
    %400 = vmatmul.bf16.gmra.mxu0 %v152
    %v401 = vpop.f32.mrf.mxu0
    %v402 = vadd.f32 %v383, %v401
    %v403 = vpop.f32.mrf.mxu0
    %v404 = vadd.f32 %v385, %v403
    %405 = vdwg.mxu0
    %v406 = vmax.f32 %v397, 0.0
    %v407 = vmax.f32 %v399, 0.0
    %v408 = vmax.f32 %v402, 0.0
    %v409 = vmax.f32 %v404, 0.0
    %v410 = vrot.slane %v406, 7
    %v411 = vrot.slane %v407, 7
    %v412 = vrot.slane %v408, 7
    %v413 = vrot.slane %v409, 7
    %v414 = vsel %vm125, %v412, %v413
    %v415 = vsel %vm125, %v411, %v412
    %v416 = vsel %vm125, %v410, %v411
    %v417 = vsel %vm125, %v413, %v410
    %v418 = vmul.f32 %v417, %v105
    %v419 = vmul.f32 %v416, %v106
    %v420 = vmul.f32 %v415, %v107
    %v421 = vmul.f32 %v414, %v108
    %v422 = vrot.slane %v406, 1
    %v423 = vrot.slane %v407, 1
    %v424 = vrot.slane %v408, 1
    %v425 = vrot.slane %v409, 1
    %v426 = vsel %vm138, %v424, %v425
    %v427 = vsel %vm138, %v423, %v424
    %v428 = vsel %vm138, %v422, %v423
    %v429 = vsel %vm138, %v425, %v422
    %v430 = vmul.f32 %v428, %v117
    %v431 = vmul.f32 %v427, %v118
    %v432 = vmul.f32 %v426, %v119
    %v433 = vmul.f32 %v429, %v120
    %v434 = vpack.c.bf16 %v419, %v418
    %v435 = vpack.c.bf16 %v407, %v406
    %v436 = vpack.c.bf16 %v431, %v430
    %v437 = vpack.c.bf16 %v421, %v420
    %v438 = vpack.c.bf16 %v409, %v408
    %v439 = vpack.c.bf16 %v433, %v432
    %v440 = vld [vmem:[#allocation8] sm:$0xf]
    %v441 = vld [vmem:[#allocation8 + $0x4] sm:$0xf]
    %v442 = vld [vmem:[#allocation8 + $0x8] sm:$0xf]
    %v443 = vld [vmem:[#allocation8 + $0xc] sm:$0xf]
    %v444 = vld [vmem:[#allocation8 + $0x10] sm:$0xf]
    %v445 = vld [vmem:[#allocation8 + $0x14] sm:$0xf]
    %v446 = vld [vmem:[#allocation8 + $0x18] sm:$0xf]
    %v447 = vld [vmem:[#allocation8 + $0x1c] sm:$0xf]
    %v448 = vld [vmem:[#allocation8 + $0x20] sm:$0xf]
    %v449 = vld [vmem:[#allocation8 + $0x24] sm:$0xf]
    %v450 = vld [vmem:[#allocation8 + $0x28] sm:$0xf]
    %v451 = vld [vmem:[#allocation8 + $0x2c] sm:$0xf]
    %v452 = vld [vmem:[#allocation8 + $0x30] sm:$0xf]
    %v453 = vld [vmem:[#allocation8 + $0x34] sm:$0xf]
    %v454 = vld [vmem:[#allocation8 + $0x38] sm:$0xf]
    %v455 = vld [vmem:[#allocation8 + $0x3c] sm:$0xf]
    %v456 = vld [vmem:[#allocation8 + $0x40] sm:$0xf]
    %v457 = vld [vmem:[#allocation8 + $0x44] sm:$0xf]
    %v458 = vld [vmem:[#allocation8 + $0x48] sm:$0xf]
    %v459 = vld [vmem:[#allocation8 + $0x4c] sm:$0xf]
    %v460 = vld [vmem:[#allocation8 + $0x50] sm:$0xf]
    %v461 = vld [vmem:[#allocation8 + $0x54] sm:$0xf]
    %v462 = vld [vmem:[#allocation8 + $0x58] sm:$0xf]
    %v463 = vld [vmem:[#allocation8 + $0x5c] sm:$0xf]
    %v464 = vld [vmem:[#allocation8 + $0x60] sm:$0xf]
    %v465 = vld [vmem:[#allocation8 + $0x64] sm:$0xf]
    %v466 = vld [vmem:[#allocation8 + $0x68] sm:$0xf]
    %v467 = vld [vmem:[#allocation8 + $0x6c] sm:$0xf]
    %v468 = vld [vmem:[#allocation8 + $0x70] sm:$0xf]
    %v469 = vld [vmem:[#allocation8 + $0x74] sm:$0xf]
    %v470 = vld [vmem:[#allocation8 + $0x78] sm:$0xf]
    %v471 = vld [vmem:[#allocation8 + $0x7c] sm:$0xf]
    %v472 = vld [vmem:[#allocation8 + $0x80] sm:$0xf]
    %v473 = vld [vmem:[#allocation8 + $0x84] sm:$0xf]
    %v474 = vld [vmem:[#allocation8 + $0x88] sm:$0xf]
    %v475 = vld [vmem:[#allocation8 + $0x8c] sm:$0xf]
    %v476 = vld [vmem:[#allocation8 + $0x90] sm:$0xf]
    %v477 = vld [vmem:[#allocation8 + $0x94] sm:$0xf]
    %v478 = vld [vmem:[#allocation8 + $0x98] sm:$0xf]
    %v479 = vld [vmem:[#allocation8 + $0x9c] sm:$0xf]
    %v480 = vld [vmem:[#allocation8 + $0xa0] sm:$0xf]
    %v481 = vld [vmem:[#allocation8 + $0xa4] sm:$0xf]
    %v482 = vld [vmem:[#allocation8 + $0xa8] sm:$0xf]
    %v483 = vld [vmem:[#allocation8 + $0xac] sm:$0xf]
    %v484 = vld [vmem:[#allocation8 + $0xb0] sm:$0xf]
    %v485 = vld [vmem:[#allocation8 + $0xb4] sm:$0xf]
    %v486 = vld [vmem:[#allocation8 + $0xb8] sm:$0xf]
    %v487 = vld [vmem:[#allocation8 + $0xbc] sm:$0xf]
    %v536 = vunpack.c.l.b16 %v440
    %v537 = vunpack.c.l.b16 %v441
    %v538 = vunpack.c.l.b16 %v442
    %v539 = vunpack.c.l.b16 %v443
    %v540 = vunpack.c.l.b16 %v444
    %v541 = vunpack.c.l.b16 %v445
    %v542 = vunpack.c.l.b16 %v446
    %v543 = vunpack.c.l.b16 %v447
    %v544 = vunpack.c.l.b16 %v448
    %v545 = vunpack.c.l.b16 %v449
    %v546 = vunpack.c.l.b16 %v450
    %v547 = vunpack.c.l.b16 %v451
    %v548 = vunpack.c.l.b16 %v452
    %v549 = vunpack.c.l.b16 %v453
    %v550 = vunpack.c.l.b16 %v454
    %v551 = vunpack.c.l.b16 %v455
    %v552 = vunpack.c.l.b16 %v456
    %v553 = vunpack.c.l.b16 %v457
    %v554 = vunpack.c.l.b16 %v458
    %v555 = vunpack.c.l.b16 %v459
    %v556 = vunpack.c.l.b16 %v460
    %v557 = vunpack.c.l.b16 %v461
    %v558 = vunpack.c.l.b16 %v462
    %v559 = vunpack.c.l.b16 %v463
    %v560 = vunpack.c.l.b16 %v464
    %v561 = vunpack.c.l.b16 %v465
    %v562 = vunpack.c.l.b16 %v466
    %v563 = vunpack.c.l.b16 %v467
    %v564 = vunpack.c.l.b16 %v468
    %v565 = vunpack.c.l.b16 %v469
    %v566 = vunpack.c.l.b16 %v470
    %v567 = vunpack.c.l.b16 %v471
    %v568 = vunpack.c.l.b16 %v472
    %v569 = vunpack.c.l.b16 %v473
    %v570 = vunpack.c.l.b16 %v474
    %v571 = vunpack.c.l.b16 %v475
    %v572 = vunpack.c.l.b16 %v476
    %v573 = vunpack.c.l.b16 %v477
    %v574 = vunpack.c.l.b16 %v478
    %v575 = vunpack.c.l.b16 %v479
    %v576 = vunpack.c.l.b16 %v480
    %v577 = vunpack.c.l.b16 %v481
    %v578 = vunpack.c.l.b16 %v482
    %v579 = vunpack.c.l.b16 %v483
    %v580 = vunpack.c.l.b16 %v484
    %v581 = vunpack.c.l.b16 %v485
    %v582 = vunpack.c.l.b16 %v486
    %v583 = vunpack.c.l.b16 %v487
    %v584 = vpack.c.b16 %v537, %v536
    %v585 = vpack.c.b16 %v539, %v538
    %v586 = vpack.c.b16 %v541, %v540
    %v587 = vpack.c.b16 %v543, %v542
    %v588 = vpack.c.b16 %v545, %v544
    %v589 = vpack.c.b16 %v547, %v546
    %v590 = vpack.c.b16 %v549, %v548
    %v591 = vpack.c.b16 %v551, %v550
    %v592 = vpack.c.b16 %v553, %v552
    %v593 = vpack.c.b16 %v555, %v554
    %v594 = vpack.c.b16 %v557, %v556
    %v595 = vpack.c.b16 %v559, %v558
    %v596 = vpack.c.b16 %v561, %v560
    %v597 = vpack.c.b16 %v563, %v562
    %v598 = vpack.c.b16 %v565, %v564
    %v599 = vpack.c.b16 %v567, %v566
    %v600 = vpack.c.b16 %v569, %v568
    %v601 = vpack.c.b16 %v571, %v570
    %v602 = vpack.c.b16 %v573, %v572
    %v603 = vpack.c.b16 %v575, %v574
    %v604 = vpack.c.b16 %v577, %v576
    %v605 = vpack.c.b16 %v579, %v578
    %v606 = vpack.c.b16 %v581, %v580
    %v607 = vpack.c.b16 %v583, %v582
    %632 = vmatpush.bf16.msra.mxu0 %v591
    %633 = vmatpush.bf16.msra.mxu0 %v590
    %634 = vmatpush.bf16.msra.mxu0 %v589
    %635 = vmatpush.bf16.msra.mxu0 %v588
    %636 = vmatpush.bf16.msra.mxu0 %v587
    %637 = vmatpush.bf16.msra.mxu0 %v586
    %638 = vmatpush.bf16.msra.mxu0 %v585
    %639 = vmatpush.bf16.msra.mxu0 %v584
    %640 = vmatmul.bf16.gmra.mxu0 %v434
    %v641 = vpop.f32.mrf.mxu0
    %v642 = vadd.f32 0.0, %v641
    %v643 = vpop.f32.mrf.mxu0
    %v644 = vadd.f32 0.0, %v643
    %645 = vmatmul.bf16.gmra.mxu0 %v437
    %v646 = vpop.f32.mrf.mxu0
    %v647 = vadd.f32 0.0, %v646
    %v648 = vpop.f32.mrf.mxu0
    %v649 = vadd.f32 0.0, %v648
    %650 = vdwg.mxu0
    %651 = vmatpush.bf16.msra.mxu0 %v599
    %652 = vmatpush.bf16.msra.mxu0 %v598
    %653 = vmatpush.bf16.msra.mxu0 %v597
    %654 = vmatpush.bf16.msra.mxu0 %v596
    %655 = vmatpush.bf16.msra.mxu0 %v595
    %656 = vmatpush.bf16.msra.mxu0 %v594
    %657 = vmatpush.bf16.msra.mxu0 %v593
    %658 = vmatpush.bf16.msra.mxu0 %v592
    %659 = vmatmul.bf16.gmra.mxu0 %v435
    %v660 = vpop.f32.mrf.mxu0
    %v661 = vadd.f32 %v642, %v660
    %v662 = vpop.f32.mrf.mxu0
    %v663 = vadd.f32 %v644, %v662
    %664 = vmatmul.bf16.gmra.mxu0 %v438
    %v665 = vpop.f32.mrf.mxu0
    %v666 = vadd.f32 %v647, %v665
    %v667 = vpop.f32.mrf.mxu0
    %v668 = vadd.f32 %v649, %v667
    %669 = vdwg.mxu0
    %670 = vmatpush.bf16.msra.mxu0 %v607
    %671 = vmatpush.bf16.msra.mxu0 %v606
    %672 = vmatpush.bf16.msra.mxu0 %v605
    %673 = vmatpush.bf16.msra.mxu0 %v604
    %674 = vmatpush.bf16.msra.mxu0 %v603
    %675 = vmatpush.bf16.msra.mxu0 %v602
    %676 = vmatpush.bf16.msra.mxu0 %v601
    %677 = vmatpush.bf16.msra.mxu0 %v600
    %678 = vmatmul.bf16.gmra.mxu0 %v436
    %v679 = vpop.f32.mrf.mxu0
    %v680 = vadd.f32 %v661, %v679
    %v681 = vpop.f32.mrf.mxu0
    %v682 = vadd.f32 %v663, %v681
    %683 = vmatmul.bf16.gmra.mxu0 %v439
    %v684 = vpop.f32.mrf.mxu0
    %v685 = vadd.f32 %v666, %v684
    %v686 = vpop.f32.mrf.mxu0
    %v687 = vadd.f32 %v668, %v686
    %688 = vdwg.mxu0
    %v689 = vadd.f32 %v84, %v680
    %v690 = vadd.f32 %v85, %v682
    %v691 = vadd.f32 %v86, %v685
    %v692 = vadd.f32 %v87, %v687
    %v693 = vld [vmem:[%s4] sm:$0x1]
    %v695 = vperm.slane %v693, 0
    %v697 = vadd.f32 %v689, %v695
    %v698 = vadd.f32 %v690, %v695
    %v699 = vadd.f32 %v691, %v695
    %v700 = vadd.f32 %v692, %v695
    %v701 = vmax.f32 %v697, 0.0
    %v702 = vmax.f32 %v698, 0.0
    %v703 = vmax.f32 %v699, 0.0
    %v704 = vmax.f32 %v700, 0.0
    %v705 = vrot.slane %v701, 7
    %v706 = vrot.slane %v702, 7
    %v707 = vrot.slane %v703, 7
    %v708 = vrot.slane %v704, 7
    %v709 = vsel %vm125, %v707, %v708
    %v710 = vsel %vm125, %v706, %v707
    %v711 = vsel %vm125, %v705, %v706
    %v712 = vsel %vm125, %v708, %v705
    %v713 = vmul.f32 %v712, %v105
    %v714 = vmul.f32 %v711, %v106
    %v715 = vmul.f32 %v710, %v107
    %v716 = vmul.f32 %v709, %v108
    %v717 = vrot.slane %v701, 1
    %v718 = vrot.slane %v702, 1
    %v719 = vrot.slane %v703, 1
    %v720 = vrot.slane %v704, 1
    %v721 = vsel %vm138, %v719, %v720
    %v722 = vsel %vm138, %v718, %v719
    %v723 = vsel %vm138, %v717, %v718
    %v724 = vsel %vm138, %v720, %v717
    %v725 = vmul.f32 %v723, %v117
    %v726 = vmul.f32 %v722, %v118
    %v727 = vmul.f32 %v721, %v119
    %v728 = vmul.f32 %v724, %v120
    %v729 = vpack.c.bf16 %v714, %v713
    %v730 = vpack.c.bf16 %v702, %v701
    %v731 = vpack.c.bf16 %v726, %v725
    %v732 = vpack.c.bf16 %v716, %v715
    %v733 = vpack.c.bf16 %v704, %v703
    %v734 = vpack.c.bf16 %v728, %v727
    %s735 = scalar_lea.vmem [#allocation5], 192
    %v736 = vld [vmem:[%s735] sm:$0xf]
    %v737 = vld [vmem:[%s735 + $0x4] sm:$0xf]
    %v738 = vld [vmem:[%s735 + $0x8] sm:$0xf]
    %v739 = vld [vmem:[%s735 + $0xc] sm:$0xf]
    %v740 = vld [vmem:[%s735 + $0x10] sm:$0xf]
    %v741 = vld [vmem:[%s735 + $0x14] sm:$0xf]
    %v742 = vld [vmem:[%s735 + $0x18] sm:$0xf]
    %v743 = vld [vmem:[%s735 + $0x1c] sm:$0xf]
    %v744 = vld [vmem:[%s735 + $0x20] sm:$0xf]
    %v745 = vld [vmem:[%s735 + $0x24] sm:$0xf]
    %v746 = vld [vmem:[%s735 + $0x28] sm:$0xf]
    %v747 = vld [vmem:[%s735 + $0x2c] sm:$0xf]
    %v748 = vld [vmem:[%s735 + $0x30] sm:$0xf]
    %v749 = vld [vmem:[%s735 + $0x34] sm:$0xf]
    %v750 = vld [vmem:[%s735 + $0x38] sm:$0xf]
    %v751 = vld [vmem:[%s735 + $0x3c] sm:$0xf]
    %v752 = vld [vmem:[%s735 + $0x40] sm:$0xf]
    %v753 = vld [vmem:[%s735 + $0x44] sm:$0xf]
    %v754 = vld [vmem:[%s735 + $0x48] sm:$0xf]
    %v755 = vld [vmem:[%s735 + $0x4c] sm:$0xf]
    %v756 = vld [vmem:[%s735 + $0x50] sm:$0xf]
    %v757 = vld [vmem:[%s735 + $0x54] sm:$0xf]
    %v758 = vld [vmem:[%s735 + $0x58] sm:$0xf]
    %v759 = vld [vmem:[%s735 + $0x5c] sm:$0xf]
    %v760 = vld [vmem:[%s735 + $0x60] sm:$0xf]
    %v761 = vld [vmem:[%s735 + $0x64] sm:$0xf]
    %v762 = vld [vmem:[%s735 + $0x68] sm:$0xf]
    %v763 = vld [vmem:[%s735 + $0x6c] sm:$0xf]
    %v764 = vld [vmem:[%s735 + $0x70] sm:$0xf]
    %v765 = vld [vmem:[%s735 + $0x74] sm:$0xf]
    %v766 = vld [vmem:[%s735 + $0x78] sm:$0xf]
    %v767 = vld [vmem:[%s735 + $0x7c] sm:$0xf]
    %v768 = vld [vmem:[%s735 + $0x80] sm:$0xf]
    %v769 = vld [vmem:[%s735 + $0x84] sm:$0xf]
    %v770 = vld [vmem:[%s735 + $0x88] sm:$0xf]
    %v771 = vld [vmem:[%s735 + $0x8c] sm:$0xf]
    %v772 = vld [vmem:[%s735 + $0x90] sm:$0xf]
    %v773 = vld [vmem:[%s735 + $0x94] sm:$0xf]
    %v774 = vld [vmem:[%s735 + $0x98] sm:$0xf]
    %v775 = vld [vmem:[%s735 + $0x9c] sm:$0xf]
    %v776 = vld [vmem:[%s735 + $0xa0] sm:$0xf]
    %v777 = vld [vmem:[%s735 + $0xa4] sm:$0xf]
    %v778 = vld [vmem:[%s735 + $0xa8] sm:$0xf]
    %v779 = vld [vmem:[%s735 + $0xac] sm:$0xf]
    %v780 = vld [vmem:[%s735 + $0xb0] sm:$0xf]
    %v781 = vld [vmem:[%s735 + $0xb4] sm:$0xf]
    %v782 = vld [vmem:[%s735 + $0xb8] sm:$0xf]
    %v783 = vld [vmem:[%s735 + $0xbc] sm:$0xf]
    %s784 = scalar_lea.vmem [#allocation7], 1
    %v785 = vld [vmem:[%s784] sm:$0x1]
    %v787 = vperm.slane %v785, 0
    %v837 = vunpack.c.l.b16 %v736
    %v838 = vunpack.c.l.b16 %v737
    %v839 = vunpack.c.l.b16 %v738
    %v840 = vunpack.c.l.b16 %v739
    %v841 = vunpack.c.l.b16 %v740
    %v842 = vunpack.c.l.b16 %v741
    %v843 = vunpack.c.l.b16 %v742
    %v844 = vunpack.c.l.b16 %v743
    %v845 = vunpack.c.l.b16 %v744
    %v846 = vunpack.c.l.b16 %v745
    %v847 = vunpack.c.l.b16 %v746
    %v848 = vunpack.c.l.b16 %v747
    %v849 = vunpack.c.l.b16 %v748
    %v850 = vunpack.c.l.b16 %v749
    %v851 = vunpack.c.l.b16 %v750
    %v852 = vunpack.c.l.b16 %v751
    %v853 = vunpack.c.l.b16 %v752
    %v854 = vunpack.c.l.b16 %v753
    %v855 = vunpack.c.l.b16 %v754
    %v856 = vunpack.c.l.b16 %v755
    %v857 = vunpack.c.l.b16 %v756
    %v858 = vunpack.c.l.b16 %v757
    %v859 = vunpack.c.l.b16 %v758
    %v860 = vunpack.c.l.b16 %v759
    %v861 = vunpack.c.l.b16 %v760
    %v862 = vunpack.c.l.b16 %v761
    %v863 = vunpack.c.l.b16 %v762
    %v864 = vunpack.c.l.b16 %v763
    %v865 = vunpack.c.l.b16 %v764
    %v866 = vunpack.c.l.b16 %v765
    %v867 = vunpack.c.l.b16 %v766
    %v868 = vunpack.c.l.b16 %v767
    %v869 = vunpack.c.l.b16 %v768
    %v870 = vunpack.c.l.b16 %v769
    %v871 = vunpack.c.l.b16 %v770
    %v872 = vunpack.c.l.b16 %v771
    %v873 = vunpack.c.l.b16 %v772
    %v874 = vunpack.c.l.b16 %v773
    %v875 = vunpack.c.l.b16 %v774
    %v876 = vunpack.c.l.b16 %v775
    %v877 = vunpack.c.l.b16 %v776
    %v878 = vunpack.c.l.b16 %v777
    %v879 = vunpack.c.l.b16 %v778
    %v880 = vunpack.c.l.b16 %v779
    %v881 = vunpack.c.l.b16 %v780
    %v882 = vunpack.c.l.b16 %v781
    %v883 = vunpack.c.l.b16 %v782
    %v884 = vunpack.c.l.b16 %v783
    %v885 = vpack.c.b16 %v838, %v837
    %v886 = vpack.c.b16 %v840, %v839
    %v887 = vpack.c.b16 %v842, %v841
    %v888 = vpack.c.b16 %v844, %v843
    %v889 = vpack.c.b16 %v846, %v845
    %v890 = vpack.c.b16 %v848, %v847
    %v891 = vpack.c.b16 %v850, %v849
    %v892 = vpack.c.b16 %v852, %v851
    %v893 = vpack.c.b16 %v854, %v853
    %v894 = vpack.c.b16 %v856, %v855
    %v895 = vpack.c.b16 %v858, %v857
    %v896 = vpack.c.b16 %v860, %v859
    %v897 = vpack.c.b16 %v862, %v861
    %v898 = vpack.c.b16 %v864, %v863
    %v899 = vpack.c.b16 %v866, %v865
    %v900 = vpack.c.b16 %v868, %v867
    %v901 = vpack.c.b16 %v870, %v869
    %v902 = vpack.c.b16 %v872, %v871
    %v903 = vpack.c.b16 %v874, %v873
    %v904 = vpack.c.b16 %v876, %v875
    %v905 = vpack.c.b16 %v878, %v877
    %v906 = vpack.c.b16 %v880, %v879
    %v907 = vpack.c.b16 %v882, %v881
    %v908 = vpack.c.b16 %v884, %v883
    %933 = vmatpush.bf16.msra.mxu0 %v892
    %934 = vmatpush.bf16.msra.mxu0 %v891
    %935 = vmatpush.bf16.msra.mxu0 %v890
    %936 = vmatpush.bf16.msra.mxu0 %v889
    %937 = vmatpush.bf16.msra.mxu0 %v888
    %938 = vmatpush.bf16.msra.mxu0 %v887
    %939 = vmatpush.bf16.msra.mxu0 %v886
    %940 = vmatpush.bf16.msra.mxu0 %v885
    %941 = vmatmul.bf16.gmra.mxu0 %v729
    %v942 = vpop.f32.mrf.mxu0
    %v943 = vadd.f32 %v787, %v942
    %v944 = vpop.f32.mrf.mxu0
    %v945 = vadd.f32 %v787, %v944
    %946 = vmatmul.bf16.gmra.mxu0 %v732
    %v947 = vpop.f32.mrf.mxu0
    %v948 = vadd.f32 %v787, %v947
    %v949 = vpop.f32.mrf.mxu0
    %v950 = vadd.f32 %v787, %v949
    %951 = vdwg.mxu0
    %952 = vmatpush.bf16.msra.mxu0 %v900
    %953 = vmatpush.bf16.msra.mxu0 %v899
    %954 = vmatpush.bf16.msra.mxu0 %v898
    %955 = vmatpush.bf16.msra.mxu0 %v897
    %956 = vmatpush.bf16.msra.mxu0 %v896
    %957 = vmatpush.bf16.msra.mxu0 %v895
    %958 = vmatpush.bf16.msra.mxu0 %v894
    %959 = vmatpush.bf16.msra.mxu0 %v893
    %960 = vmatmul.bf16.gmra.mxu0 %v730
    %v961 = vpop.f32.mrf.mxu0
    %v962 = vadd.f32 %v943, %v961
    %v963 = vpop.f32.mrf.mxu0
    %v964 = vadd.f32 %v945, %v963
    %965 = vmatmul.bf16.gmra.mxu0 %v733
    %v966 = vpop.f32.mrf.mxu0
    %v967 = vadd.f32 %v948, %v966
    %v968 = vpop.f32.mrf.mxu0
    %v969 = vadd.f32 %v950, %v968
    %970 = vdwg.mxu0
    %971 = vmatpush.bf16.msra.mxu0 %v908
    %972 = vmatpush.bf16.msra.mxu0 %v907
    %973 = vmatpush.bf16.msra.mxu0 %v906
    %974 = vmatpush.bf16.msra.mxu0 %v905
    %975 = vmatpush.bf16.msra.mxu0 %v904
    %976 = vmatpush.bf16.msra.mxu0 %v903
    %977 = vmatpush.bf16.msra.mxu0 %v902
    %978 = vmatpush.bf16.msra.mxu0 %v901
    %979 = vmatmul.bf16.gmra.mxu0 %v731
    %v980 = vpop.f32.mrf.mxu0
    %v981 = vadd.f32 %v962, %v980
    %v982 = vpop.f32.mrf.mxu0
    %v983 = vadd.f32 %v964, %v982
    %984 = vmatmul.bf16.gmra.mxu0 %v734
    %v985 = vpop.f32.mrf.mxu0
    %v986 = vadd.f32 %v967, %v985
    %v987 = vpop.f32.mrf.mxu0
    %v988 = vadd.f32 %v969, %v987
    %989 = vdwg.mxu0
    %v990 = vmax.f32 %v981, 0.0
    %v991 = vmax.f32 %v983, 0.0
    %v992 = vmax.f32 %v986, 0.0
    %v993 = vmax.f32 %v988, 0.0
    %v994 = vrot.slane %v990, 7
    %v995 = vrot.slane %v991, 7
    %v996 = vrot.slane %v992, 7
    %v997 = vrot.slane %v993, 7
    %v998 = vsel %vm125, %v996, %v997
    %v999 = vsel %vm125, %v995, %v996
    %v1000 = vsel %vm125, %v994, %v995
    %v1001 = vsel %vm125, %v997, %v994
    %v1002 = vmul.f32 %v1001, %v105
    %v1003 = vmul.f32 %v1000, %v106
    %v1004 = vmul.f32 %v999, %v107
    %v1005 = vmul.f32 %v998, %v108
    %v1006 = vrot.slane %v990, 1
    %v1007 = vrot.slane %v991, 1
    %v1008 = vrot.slane %v992, 1
    %v1009 = vrot.slane %v993, 1
    %v1010 = vsel %vm138, %v1008, %v1009
    %v1011 = vsel %vm138, %v1007, %v1008
    %v1012 = vsel %vm138, %v1006, %v1007
    %v1013 = vsel %vm138, %v1009, %v1006
    %v1014 = vmul.f32 %v1012, %v117
    %v1015 = vmul.f32 %v1011, %v118
    %v1016 = vmul.f32 %v1010, %v119
    %v1017 = vmul.f32 %v1013, %v120
    %v1018 = vpack.c.bf16 %v1003, %v1002
    %v1019 = vpack.c.bf16 %v991, %v990
    %v1020 = vpack.c.bf16 %v1015, %v1014
    %v1021 = vpack.c.bf16 %v1005, %v1004
    %v1022 = vpack.c.bf16 %v993, %v992
    %v1023 = vpack.c.bf16 %v1017, %v1016
    %s1024 = scalar_lea.vmem [#allocation8], 192
    %v1025 = vld [vmem:[%s1024] sm:$0xf]
    %v1026 = vld [vmem:[%s1024 + $0x4] sm:$0xf]
    %v1027 = vld [vmem:[%s1024 + $0x8] sm:$0xf]
    %v1028 = vld [vmem:[%s1024 + $0xc] sm:$0xf]
    %v1029 = vld [vmem:[%s1024 + $0x10] sm:$0xf]
    %v1030 = vld [vmem:[%s1024 + $0x14] sm:$0xf]
    %v1031 = vld [vmem:[%s1024 + $0x18] sm:$0xf]
    %v1032 = vld [vmem:[%s1024 + $0x1c] sm:$0xf]
    %v1033 = vld [vmem:[%s1024 + $0x20] sm:$0xf]
    %v1034 = vld [vmem:[%s1024 + $0x24] sm:$0xf]
    %v1035 = vld [vmem:[%s1024 + $0x28] sm:$0xf]
    %v1036 = vld [vmem:[%s1024 + $0x2c] sm:$0xf]
    %v1037 = vld [vmem:[%s1024 + $0x30] sm:$0xf]
    %v1038 = vld [vmem:[%s1024 + $0x34] sm:$0xf]
    %v1039 = vld [vmem:[%s1024 + $0x38] sm:$0xf]
    %v1040 = vld [vmem:[%s1024 + $0x3c] sm:$0xf]
    %v1041 = vld [vmem:[%s1024 + $0x40] sm:$0xf]
    %v1042 = vld [vmem:[%s1024 + $0x44] sm:$0xf]
    %v1043 = vld [vmem:[%s1024 + $0x48] sm:$0xf]
    %v1044 = vld [vmem:[%s1024 + $0x4c] sm:$0xf]
    %v1045 = vld [vmem:[%s1024 + $0x50] sm:$0xf]
    %v1046 = vld [vmem:[%s1024 + $0x54] sm:$0xf]
    %v1047 = vld [vmem:[%s1024 + $0x58] sm:$0xf]
    %v1048 = vld [vmem:[%s1024 + $0x5c] sm:$0xf]
    %v1049 = vld [vmem:[%s1024 + $0x60] sm:$0xf]
    %v1050 = vld [vmem:[%s1024 + $0x64] sm:$0xf]
    %v1051 = vld [vmem:[%s1024 + $0x68] sm:$0xf]
    %v1052 = vld [vmem:[%s1024 + $0x6c] sm:$0xf]
    %v1053 = vld [vmem:[%s1024 + $0x70] sm:$0xf]
    %v1054 = vld [vmem:[%s1024 + $0x74] sm:$0xf]
    %v1055 = vld [vmem:[%s1024 + $0x78] sm:$0xf]
    %v1056 = vld [vmem:[%s1024 + $0x7c] sm:$0xf]
    %v1057 = vld [vmem:[%s1024 + $0x80] sm:$0xf]
    %v1058 = vld [vmem:[%s1024 + $0x84] sm:$0xf]
    %v1059 = vld [vmem:[%s1024 + $0x88] sm:$0xf]
    %v1060 = vld [vmem:[%s1024 + $0x8c] sm:$0xf]
    %v1061 = vld [vmem:[%s1024 + $0x90] sm:$0xf]
    %v1062 = vld [vmem:[%s1024 + $0x94] sm:$0xf]
    %v1063 = vld [vmem:[%s1024 + $0x98] sm:$0xf]
    %v1064 = vld [vmem:[%s1024 + $0x9c] sm:$0xf]
    %v1065 = vld [vmem:[%s1024 + $0xa0] sm:$0xf]
    %v1066 = vld [vmem:[%s1024 + $0xa4] sm:$0xf]
    %v1067 = vld [vmem:[%s1024 + $0xa8] sm:$0xf]
    %v1068 = vld [vmem:[%s1024 + $0xac] sm:$0xf]
    %v1069 = vld [vmem:[%s1024 + $0xb0] sm:$0xf]
    %v1070 = vld [vmem:[%s1024 + $0xb4] sm:$0xf]
    %v1071 = vld [vmem:[%s1024 + $0xb8] sm:$0xf]
    %v1072 = vld [vmem:[%s1024 + $0xbc] sm:$0xf]
    %v1121 = vunpack.c.l.b16 %v1025
    %v1122 = vunpack.c.l.b16 %v1026
    %v1123 = vunpack.c.l.b16 %v1027
    %v1124 = vunpack.c.l.b16 %v1028
    %v1125 = vunpack.c.l.b16 %v1029
    %v1126 = vunpack.c.l.b16 %v1030
    %v1127 = vunpack.c.l.b16 %v1031
    %v1128 = vunpack.c.l.b16 %v1032
    %v1129 = vunpack.c.l.b16 %v1033
    %v1130 = vunpack.c.l.b16 %v1034
    %v1131 = vunpack.c.l.b16 %v1035
    %v1132 = vunpack.c.l.b16 %v1036
    %v1133 = vunpack.c.l.b16 %v1037
    %v1134 = vunpack.c.l.b16 %v1038
    %v1135 = vunpack.c.l.b16 %v1039
    %v1136 = vunpack.c.l.b16 %v1040
    %v1137 = vunpack.c.l.b16 %v1041
    %v1138 = vunpack.c.l.b16 %v1042
    %v1139 = vunpack.c.l.b16 %v1043
    %v1140 = vunpack.c.l.b16 %v1044
    %v1141 = vunpack.c.l.b16 %v1045
    %v1142 = vunpack.c.l.b16 %v1046
    %v1143 = vunpack.c.l.b16 %v1047
    %v1144 = vunpack.c.l.b16 %v1048
    %v1145 = vunpack.c.l.b16 %v1049
    %v1146 = vunpack.c.l.b16 %v1050
    %v1147 = vunpack.c.l.b16 %v1051
    %v1148 = vunpack.c.l.b16 %v1052
    %v1149 = vunpack.c.l.b16 %v1053
    %v1150 = vunpack.c.l.b16 %v1054
    %v1151 = vunpack.c.l.b16 %v1055
    %v1152 = vunpack.c.l.b16 %v1056
    %v1153 = vunpack.c.l.b16 %v1057
    %v1154 = vunpack.c.l.b16 %v1058
    %v1155 = vunpack.c.l.b16 %v1059
    %v1156 = vunpack.c.l.b16 %v1060
    %v1157 = vunpack.c.l.b16 %v1061
    %v1158 = vunpack.c.l.b16 %v1062
    %v1159 = vunpack.c.l.b16 %v1063
    %v1160 = vunpack.c.l.b16 %v1064
    %v1161 = vunpack.c.l.b16 %v1065
    %v1162 = vunpack.c.l.b16 %v1066
    %v1163 = vunpack.c.l.b16 %v1067
    %v1164 = vunpack.c.l.b16 %v1068
    %v1165 = vunpack.c.l.b16 %v1069
    %v1166 = vunpack.c.l.b16 %v1070
    %v1167 = vunpack.c.l.b16 %v1071
    %v1168 = vunpack.c.l.b16 %v1072
    %v1169 = vpack.c.b16 %v1122, %v1121
    %v1170 = vpack.c.b16 %v1124, %v1123
    %v1171 = vpack.c.b16 %v1126, %v1125
    %v1172 = vpack.c.b16 %v1128, %v1127
    %v1173 = vpack.c.b16 %v1130, %v1129
    %v1174 = vpack.c.b16 %v1132, %v1131
    %v1175 = vpack.c.b16 %v1134, %v1133
    %v1176 = vpack.c.b16 %v1136, %v1135
    %v1177 = vpack.c.b16 %v1138, %v1137
    %v1178 = vpack.c.b16 %v1140, %v1139
    %v1179 = vpack.c.b16 %v1142, %v1141
    %v1180 = vpack.c.b16 %v1144, %v1143
    %v1181 = vpack.c.b16 %v1146, %v1145
    %v1182 = vpack.c.b16 %v1148, %v1147
    %v1183 = vpack.c.b16 %v1150, %v1149
    %v1184 = vpack.c.b16 %v1152, %v1151
    %v1185 = vpack.c.b16 %v1154, %v1153
    %v1186 = vpack.c.b16 %v1156, %v1155
    %v1187 = vpack.c.b16 %v1158, %v1157
    %v1188 = vpack.c.b16 %v1160, %v1159
    %v1189 = vpack.c.b16 %v1162, %v1161
    %v1190 = vpack.c.b16 %v1164, %v1163
    %v1191 = vpack.c.b16 %v1166, %v1165
    %v1192 = vpack.c.b16 %v1168, %v1167
    %1217 = vmatpush.bf16.msra.mxu0 %v1176
    %1218 = vmatpush.bf16.msra.mxu0 %v1175
    %1219 = vmatpush.bf16.msra.mxu0 %v1174
    %1220 = vmatpush.bf16.msra.mxu0 %v1173
    %1221 = vmatpush.bf16.msra.mxu0 %v1172
    %1222 = vmatpush.bf16.msra.mxu0 %v1171
    %1223 = vmatpush.bf16.msra.mxu0 %v1170
    %1224 = vmatpush.bf16.msra.mxu0 %v1169
    %1225 = vmatmul.bf16.gmra.mxu0 %v1018
    %v1226 = vpop.f32.mrf.mxu0
    %v1227 = vadd.f32 0.0, %v1226
    %v1228 = vpop.f32.mrf.mxu0
    %v1229 = vadd.f32 0.0, %v1228
    %1230 = vmatmul.bf16.gmra.mxu0 %v1021
    %v1231 = vpop.f32.mrf.mxu0
    %v1232 = vadd.f32 0.0, %v1231
    %v1233 = vpop.f32.mrf.mxu0
    %v1234 = vadd.f32 0.0, %v1233
    %1235 = vdwg.mxu0
    %1236 = vmatpush.bf16.msra.mxu0 %v1184
    %1237 = vmatpush.bf16.msra.mxu0 %v1183
    %1238 = vmatpush.bf16.msra.mxu0 %v1182
    %1239 = vmatpush.bf16.msra.mxu0 %v1181
    %1240 = vmatpush.bf16.msra.mxu0 %v1180
    %1241 = vmatpush.bf16.msra.mxu0 %v1179
    %1242 = vmatpush.bf16.msra.mxu0 %v1178
    %1243 = vmatpush.bf16.msra.mxu0 %v1177
    %1244 = vmatmul.bf16.gmra.mxu0 %v1019
    %v1245 = vpop.f32.mrf.mxu0
    %v1246 = vadd.f32 %v1227, %v1245
    %v1247 = vpop.f32.mrf.mxu0
    %v1248 = vadd.f32 %v1229, %v1247
    %1249 = vmatmul.bf16.gmra.mxu0 %v1022
    %v1250 = vpop.f32.mrf.mxu0
    %v1251 = vadd.f32 %v1232, %v1250
    %v1252 = vpop.f32.mrf.mxu0
    %v1253 = vadd.f32 %v1234, %v1252
    %1254 = vdwg.mxu0
    %1255 = vmatpush.bf16.msra.mxu0 %v1192
    %1256 = vmatpush.bf16.msra.mxu0 %v1191
    %1257 = vmatpush.bf16.msra.mxu0 %v1190
    %1258 = vmatpush.bf16.msra.mxu0 %v1189
    %1259 = vmatpush.bf16.msra.mxu0 %v1188
    %1260 = vmatpush.bf16.msra.mxu0 %v1187
    %1261 = vmatpush.bf16.msra.mxu0 %v1186
    %1262 = vmatpush.bf16.msra.mxu0 %v1185
    %1263 = vmatmul.bf16.gmra.mxu0 %v1020
    %v1264 = vpop.f32.mrf.mxu0
    %v1265 = vadd.f32 %v1246, %v1264
    %v1266 = vpop.f32.mrf.mxu0
    %v1267 = vadd.f32 %v1248, %v1266
    %1268 = vmatmul.bf16.gmra.mxu0 %v1023
    %v1269 = vpop.f32.mrf.mxu0
    %v1270 = vadd.f32 %v1251, %v1269
    %v1271 = vpop.f32.mrf.mxu0
    %v1272 = vadd.f32 %v1253, %v1271
    %1273 = vdwg.mxu0
    %v1274 = vadd.f32 %v701, %v1265
    %v1275 = vadd.f32 %v702, %v1267
    %v1276 = vadd.f32 %v703, %v1270
    %v1277 = vadd.f32 %v704, %v1272
    %s1278 = scalar_lea.vmem %s4, 1
    %v1279 = vld [vmem:[%s1278] sm:$0x1]
    %v1281 = vperm.slane %v1279, 0
    %v1283 = vadd.f32 %v1274, %v1281
    %v1284 = vadd.f32 %v1275, %v1281
    %v1285 = vadd.f32 %v1276, %v1281
    %v1286 = vadd.f32 %v1277, %v1281
    %v1287 = vmax.f32 %v1283, 0.0
    %v1288 = vmax.f32 %v1284, 0.0
    %v1289 = vmax.f32 %v1285, 0.0
    %v1290 = vmax.f32 %v1286, 0.0
    %1291 = vst [vmem:[#allocation10] sm:$0xff] %v1287
    %1292 = vst [vmem:[#allocation10 + $0x8] sm:$0xff] %v1288
    %1293 = vst [vmem:[#allocation10 + $0x10] sm:$0xff] %v1289
    %1294 = vst [vmem:[#allocation10 + $0x18] sm:$0xff] %v1290
    // Predicated region
    $region38: #{tpu_custom_call.1} parent=1 // pred_check
      _
    $region39: #{tpu_custom_call.1} parent=1 // pred_check_branch
      %1296 = sbr.rel (0) target = $region41
    $region40: #{tpu_custom_call.1} parent=1 // pred_region
      %1298 = vsyncadd [#allocation4], 0
      %s1299 = sshll.u32 [#allocation10], 4
      %s1300 = int_to_ptr.vmem [resolvable:$true] %s1299
      %s1301 = sshll.u32 %s5, 4
      %s1302 = int_to_ptr.hbm [resolvable:$true] %s1301
      %1307 = dma.vmem_to_hbm [thread:$0]  %s1300, 512, %s1302, [#allocation4], 128, 128, 8
    $region41: #{tpu_custom_call.1} parent=1 // pred_fallthru
      _
    // Predicated region
    $region42: #{tpu_custom_call.1} parent=1 // pred_check
      _
    $region43: #{tpu_custom_call.1} parent=1 // pred_check_branch
      %1309 = sbr.rel (0) target = $region45
    $region44: #{tpu_custom_call.1} parent=1 // pred_region
      %1311 = dma.done [#allocation4], 512
    $region45: #{tpu_custom_call.1} parent=1 // pred_fallthru
      _
    %1312 = vsyncpa [#allocation3], 1
    %1313 = vsyncpa [#allocation6], 1
    %1314 = vsyncpa [#allocation9], 1
    %1315 = vsyncpa [#allocation4], 1

</llo_original>
